<compile_context>
chip_gen: v7x
topology: tpu7x:2x2x1
jax: 0.10.0
libtpu: 0.0.40
codegen_flags: <defaults>
</compile_context>

<pallas_src>
from functools import partial

import numpy as np
import jax
import jax.numpy as jnp
from jax.experimental import pallas as pl
from jax.experimental.pallas import tpu as pltpu

DOF = 7          # franka.yml -> 7 joints
N_SPH = 16       # synthetic robot collision-sphere count
ROBOT_SPH_RADIUS = 0.05
MARGIN = 0.02    # cfg.margin (collision_activation_distance)
MAX_ROW_TILE = 512  # cap on rows (B*H) per grid step; multiple of 128


# ----------------------------- Pallas kernel ------------------------------ #
def _collision_cost_kernel(q_ref, w_ref, thr_ref, p_ref, out_ref, *,
                           n_sph, n_obs_sph, n_obs_box):
    """One grid step = ROW_TILE trajectory rows (flattened over B and H).

    q_ref   : (DOF+1, TM)   joint config per row (transposed, +ones row)
    w_ref   : (3S, DOF+1)   synthetic FK weights with bias folded in
    thr_ref : (S, TM)       margin + robot sphere radius (pre-broadcast)
    p_ref   : (P_pad, TM)   per-row obstacle params
                            [4*Ks sphere params | 6*Kb cuboid params | pad]
    out_ref : (1, TM)       per-row collision cost (sum over robot spheres)
    """
    S = n_sph

    # FK on the MXU: (3S, DOF+1) @ (DOF+1, TM) -> (3S, TM). Bias rides inside
    # the matmul through the augmented ones row -> no separate bias add.
    fk = jnp.dot(w_ref[...], q_ref[...], preferred_element_type=jnp.float32)
    X = fk[0 * S:1 * S, :]                                        # (S, TM)
    Y = fk[1 * S:2 * S, :]
    Z = fk[2 * S:3 * S, :]

    thr = thr_ref[...]                                            # (S, TM)
    p = p_ref[...]                                                # (P_pad, TM)

    # cost starts at 0, so the relu folds into the running max over obstacles.
    cost = jnp.zeros_like(X)                                      # (S, TM)

    off = 0
    # --- sphere obstacles: penetration = margin + r_robot + r_obs - dist ---
    for _ in range(n_obs_sph):                                    # static unroll
        cx = p[off + 0:off + 1, :]
        cy = p[off + 1:off + 2, :]
        cz = p[off + 2:off + 3, :]
        orad = p[off + 3:off + 4, :]
        off += 4
        d = jnp.sqrt((X - cx) ** 2 + (Y - cy) ** 2 + (Z - cz) ** 2)
        cost = jnp.maximum(cost, (thr - d) + orad)

    # --- cuboid obstacles (axis-aligned; default-env quats are identity) ---
    for _ in range(n_obs_box):                                    # static unroll
        cx = p[off + 0:off + 1, :]
        cy = p[off + 1:off + 2, :]
        cz = p[off + 2:off + 3, :]
        hx = p[off + 3:off + 4, :]
        hy = p[off + 4:off + 5, :]
        hz = p[off + 5:off + 6, :]
        off += 6
        dx = jnp.abs(X - cx) - hx
        dy = jnp.abs(Y - cy) - hy
        dz = jnp.abs(Z - cz) - hz
        outside = jnp.sqrt(jnp.maximum(dx, 0.0) ** 2
                           + jnp.maximum(dy, 0.0) ** 2
                           + jnp.maximum(dz, 0.0) ** 2)
        inside = jnp.minimum(jnp.maximum(dx, jnp.maximum(dy, dz)), 0.0)
        sdf = outside + inside                                    # box SDF at center
        cost = jnp.maximum(cost, thr - sdf)

    # sum over robot spheres (cfg.sum_dist=True) -> lane-dense (1, TM) store
    out_ref[...] = jnp.sum(cost, axis=0, keepdims=True)


def collision_cost_pallas(q, obs_sph, obs_box, W, b, rr,
                          margin=MARGIN, max_row_tile=MAX_ROW_TILE):
    """q: (B, H, DOF) float32 -> cost (B, H) float32."""
    B, H, D = q.shape
    S = rr.shape[-1]
    Ks = obs_sph.shape[1]
    Kb = obs_box.shape[1]
    N = B * H

    # Adaptive row tile: lane-aligned (multiple of 128), no bigger than the
    # (padded) problem, capped so the vreg working set stays resident.
    row_tile = min(max_row_tile, 128 * pl.cdiv(N, 128))
    n_tiles = pl.cdiv(N, row_tile)
    N_pad = n_tiles * row_tile

    # ---- host-side layout plumbing (rows land on the 128-lane axis) ----
    # q^T augmented with a ones row so the FK bias is fused into the matmul.
    q_t = jnp.concatenate(
        [q.reshape(N, D).astype(jnp.float32).T,
         jnp.ones((1, N), jnp.float32)], axis=0)                  # (D+1, N)
    q_t = jnp.pad(q_t, ((0, 0), (0, N_pad - N)))

    # Augmented FK weights: (3S, D+1) with the bias in the last column.
    w_aug = jnp.concatenate([W.T, b.reshape(1, 3 * S).T], axis=1)  # (3S, D+1)

    # margin + robot radius, hoisted & pre-broadcast to a full row tile.
    thr = jnp.broadcast_to((margin + rr).reshape(S, 1).astype(jnp.float32),
                           (S, row_tile))

    # Per-row obstacle params: env params replicated over that env's H steps,
    # transposed so rows land on lanes, padded to a multiple of 8 sublanes.
    P = 4 * Ks + 6 * Kb
    P_pad = 8 * pl.cdiv(P, 8)
    env_params = jnp.concatenate(
        [obs_sph.reshape(B, 4 * Ks), obs_box.reshape(B, 6 * Kb)], axis=-1)
    row_params = jnp.repeat(env_params, H, axis=0).T               # (P, N)
    row_params = jnp.pad(row_params, ((0, P_pad - P), (0, N_pad - N)))

    out = pl.pallas_call(
        partial(_collision_cost_kernel, n_sph=S, n_obs_sph=Ks, n_obs_box=Kb),
        out_shape=jax.ShapeDtypeStruct((1, N_pad), jnp.float32),
        grid=(n_tiles,),
        in_specs=[
            pl.BlockSpec((D + 1, row_tile), lambda j: (0, j)),     # q^T rows
            pl.BlockSpec((3 * S, D + 1), lambda j: (0, 0)),        # FK weights
            pl.BlockSpec((S, row_tile), lambda j: (0, 0)),         # margin + R
            pl.BlockSpec((P_pad, row_tile), lambda j: (0, j)),     # obstacles
        ],
        out_specs=pl.BlockSpec((1, row_tile), lambda j: (0, j)),
        compiler_params=pltpu.CompilerParams(
            dimension_semantics=("parallel",)),
    )(q_t, w_aug, thr, row_params)

    return out[0, :N].reshape(B, H)


# ------------------------ default env (no curobo) -------------------------- #
def make_default_world(n_env, n_obs=1, add_floor=True, add_wall=True,
                       base_seed=0):
    """Mirrors make_default_env()'s RNG stream; returns packed obstacle arrays.

    spheres: (n_env, n_obs, 4)  [cx, cy, cz, r]        (padded w/ far dummies)
    boxes:   (n_env, Kb, 6)     [cx, cy, cz, hx, hy, hz] (half-dims)
    """
    sph_all, box_all = [], []
    for seed in range(n_env):
        boxes, sph = [], []
        rng = np.random.default_rng(base_seed + seed)
        if add_floor:
            boxes.append([0.0, 0.0, -0.1, 1.0, 1.0, 0.1])
        if add_wall:
            boxes += [[-0.3, 0.0, 0.5, 0.1, 0.5, 0.5],
                      [0.0, -0.3, 0.5, 0.5, 0.1, 0.5],
                      [0.0, 0.0, 0.9, 0.5, 0.5, 0.1]]
        num_obstacles = int(rng.integers(1, n_obs + 1))
        lo = (0.143, 0.3, 0.45)
        hi = (0.5, 0.3, 0.45)
        for _ in range(num_obstacles):
            pos = rng.uniform(lo, hi)
            rad = float(rng.uniform(0.1, 0.1))
            sph.append([float(pos[0]), float(pos[1]), float(pos[2]), rad])
        while len(sph) < n_obs:                 # pad with "far away" dummies
            sph.append([1e6, 1e6, 1e6, 0.0])
        sph_all.append(sph)
        box_all.append(boxes)
    return (jnp.asarray(sph_all, jnp.float32),
            jnp.asarray(box_all, jnp.float32))


# ------------------------------ module wrapper ------------------------------ #
class CuroboCostPallas:
    def __init__(self, batch_size: int, margin: float = MARGIN, seed: int = 0):
        self.margin = float(margin)
        key = jax.random.PRNGKey(seed)
        # Synthetic linear FK parameters (deterministic init).
        self.W = 0.1 * jax.random.normal(key, (DOF, 3 * N_SPH), jnp.float32)
        self.b = jnp.concatenate([
            jnp.full((1, N_SPH), 0.30, jnp.float32),   # x bias
            jnp.full((1, N_SPH), 0.30, jnp.float32),   # y bias
            jnp.full((1, N_SPH), 0.45, jnp.float32),   # z bias
        ], axis=-1)
        self.rr = jnp.full((1, N_SPH), ROBOT_SPH_RADIUS, jnp.float32)
        # Default world: floor + 3 walls + 1 sphere obstacle per env.
        self.obs_sph, self.obs_box = make_default_world(
            batch_size, n_obs=1, add_floor=True, add_wall=True, base_seed=0)

    def forward(self, q, c=None, reduce=False, q0=None, q1=None):
        # TODO(synk): c (world re-encoding / reset) not supported in this
        # synthetic port; the default world built in __init__ is used.
        qs = q.shape
        q_flat = q.reshape(-1, qs[-2], qs[-1]).astype(jnp.float32)
        sdf = collision_cost_pallas(q_flat, self.obs_sph, self.obs_box,
                                    self.W, self.b, self.rr, self.margin)
        sdf = sdf.reshape(qs[:-1])
        if reduce:
            sdf = sdf.sum()
        return sdf

    __call__ = forward


# ---------------------------------- main ------------------------------------ #
if __name__ == "__main__":
    B, H = 2, 8                                   # batch of envs, horizon
    key = jax.random.PRNGKey(0)
    q = 0.5 * jax.random.normal(key, (B, H, DOF), jnp.float32)  # joint traj

    cost_mod = CuroboCostPallas(batch_size=B, margin=MARGIN, seed=0)

    sdf = cost_mod(q)                             # (B, H)
    sdf = jax.block_until_ready(sdf)

    total = cost_mod(q, reduce=True)              # scalar
    total = jax.block_until_ready(total)

    assert sdf.shape == (B, H)
    assert jnp.all(jnp.isfinite(sdf))
    assert jnp.isfinite(total)
    print("KERNEL_OK")
</pallas_src>

<mosaic_0001>
module attributes {stable_mosaic.version = 11 : i64} {
  func.func @_collision_cost_kernel(%arg0: i32, %arg1: memref<8x128xf32, #tpu.memory_space<vmem>>, %arg2: memref<48x8xf32, #tpu.memory_space<vmem>>, %arg3: memref<16x128xf32, #tpu.memory_space<vmem>>, %arg4: memref<32x128xf32, #tpu.memory_space<vmem>>, %arg5: memref<1x128xf32, #tpu.memory_space<vmem>>) attributes {dimension_semantics = [#tpu.dimension_semantics<parallel>], iteration_bounds = array<i64: 1>, scalar_prefetch = 0 : i64, scratch_operands = 0 : i64, tpu.core_type = #tpu.core_type<tc>, window_params = [{transform_indices = @transform_0, window_bounds = array<i64: 8, 128>}, {pipeline_mode = #tpu.pipeline_mode<synchronous>, transform_indices = @transform_1, window_bounds = array<i64: 48, 8>}, {pipeline_mode = #tpu.pipeline_mode<synchronous>, transform_indices = @transform_2, window_bounds = array<i64: 16, 128>}, {transform_indices = @transform_3, window_bounds = array<i64: 32, 128>}, {transform_indices = @transform_4, window_bounds = array<i64: 1, 128>}]} {
    %c0 = arith.constant 0 : index
    %c0_0 = arith.constant 0 : index
    %0 = vector.load %arg2[%c0, %c0_0] : memref<48x8xf32, #tpu.memory_space<vmem>>, vector<48x8xf32>
    %c0_1 = arith.constant 0 : index
    %c0_2 = arith.constant 0 : index
    %1 = vector.load %arg1[%c0_1, %c0_2] : memref<8x128xf32, #tpu.memory_space<vmem>>, vector<8x128xf32>
    %cst = arith.constant dense<0.000000e+00> : vector<48x128xf32>
    %2 = tpu.matmul %0, %1, %cst {dimension_numbers = #tpu.dot_dimension_numbers<[1], [0], [0], [1], [0, 0, 1, 1], [], []>} : vector<48x8xf32>, vector<8x128xf32>, vector<48x128xf32> -> vector<48x128xf32>
    %3 = vector.extract_strided_slice %2 {offsets = [0, 0], sizes = [16, 128], strides = [1, 1]} : vector<48x128xf32> to vector<16x128xf32>
    %4 = vector.extract_strided_slice %2 {offsets = [16, 0], sizes = [16, 128], strides = [1, 1]} : vector<48x128xf32> to vector<16x128xf32>
    %5 = vector.extract_strided_slice %2 {offsets = [32, 0], sizes = [16, 128], strides = [1, 1]} : vector<48x128xf32> to vector<16x128xf32>
    %c0_3 = arith.constant 0 : index
    %c0_4 = arith.constant 0 : index
    %6 = vector.load %arg3[%c0_3, %c0_4] : memref<16x128xf32, #tpu.memory_space<vmem>>, vector<16x128xf32>
    %c0_5 = arith.constant 0 : index
    %c0_6 = arith.constant 0 : index
    %7 = vector.load %arg4[%c0_5, %c0_6] : memref<32x128xf32, #tpu.memory_space<vmem>>, vector<32x128xf32>
    %cst_7 = arith.constant 0.000000e+00 : f32
    %8 = vector.broadcast %cst_7 : f32 to vector<16x128xf32>
    %9 = vector.extract_strided_slice %7 {offsets = [0, 0], sizes = [1, 128], strides = [1, 1]} : vector<32x128xf32> to vector<1x128xf32>
    %10 = vector.extract_strided_slice %7 {offsets = [1, 0], sizes = [1, 128], strides = [1, 1]} : vector<32x128xf32> to vector<1x128xf32>
    %11 = vector.extract_strided_slice %7 {offsets = [2, 0], sizes = [1, 128], strides = [1, 1]} : vector<32x128xf32> to vector<1x128xf32>
    %12 = vector.extract_strided_slice %7 {offsets = [3, 0], sizes = [1, 128], strides = [1, 1]} : vector<32x128xf32> to vector<1x128xf32>
    %13 = vector.broadcast %9 : vector<1x128xf32> to vector<16x128xf32>
    %14 = arith.subf %3, %13 : vector<16x128xf32>
    %15 = arith.mulf %14, %14 : vector<16x128xf32>
    %16 = vector.broadcast %10 : vector<1x128xf32> to vector<16x128xf32>
    %17 = arith.subf %4, %16 : vector<16x128xf32>
    %18 = arith.mulf %17, %17 : vector<16x128xf32>
    %19 = arith.addf %15, %18 : vector<16x128xf32>
    %20 = vector.broadcast %11 : vector<1x128xf32> to vector<16x128xf32>
    %21 = arith.subf %5, %20 : vector<16x128xf32>
    %22 = arith.mulf %21, %21 : vector<16x128xf32>
    %23 = arith.addf %19, %22 : vector<16x128xf32>
    %24 = math.sqrt %23 : vector<16x128xf32>
    %25 = arith.subf %6, %24 : vector<16x128xf32>
    %26 = vector.broadcast %12 : vector<1x128xf32> to vector<16x128xf32>
    %27 = arith.addf %25, %26 : vector<16x128xf32>
    %28 = arith.maximumf %8, %27 : vector<16x128xf32>
    %29 = vector.extract_strided_slice %7 {offsets = [4, 0], sizes = [1, 128], strides = [1, 1]} : vector<32x128xf32> to vector<1x128xf32>
    %30 = vector.extract_strided_slice %7 {offsets = [5, 0], sizes = [1, 128], strides = [1, 1]} : vector<32x128xf32> to vector<1x128xf32>
    %31 = vector.extract_strided_slice %7 {offsets = [6, 0], sizes = [1, 128], strides = [1, 1]} : vector<32x128xf32> to vector<1x128xf32>
    %32 = vector.extract_strided_slice %7 {offsets = [7, 0], sizes = [1, 128], strides = [1, 1]} : vector<32x128xf32> to vector<1x128xf32>
    %33 = vector.extract_strided_slice %7 {offsets = [8, 0], sizes = [1, 128], strides = [1, 1]} : vector<32x128xf32> to vector<1x128xf32>
    %34 = vector.extract_strided_slice %7 {offsets = [9, 0], sizes = [1, 128], strides = [1, 1]} : vector<32x128xf32> to vector<1x128xf32>
    %35 = vector.broadcast %29 : vector<1x128xf32> to vector<16x128xf32>
    %36 = arith.subf %3, %35 : vector<16x128xf32>
    %37 = math.absf %36 : vector<16x128xf32>
    %38 = vector.broadcast %32 : vector<1x128xf32> to vector<16x128xf32>
    %39 = arith.subf %37, %38 : vector<16x128xf32>
    %40 = vector.broadcast %30 : vector<1x128xf32> to vector<16x128xf32>
    %41 = arith.subf %4, %40 : vector<16x128xf32>
    %42 = math.absf %41 : vector<16x128xf32>
    %43 = vector.broadcast %33 : vector<1x128xf32> to vector<16x128xf32>
    %44 = arith.subf %42, %43 : vector<16x128xf32>
    %45 = vector.broadcast %31 : vector<1x128xf32> to vector<16x128xf32>
    %46 = arith.subf %5, %45 : vector<16x128xf32>
    %47 = math.absf %46 : vector<16x128xf32>
    %48 = vector.broadcast %34 : vector<1x128xf32> to vector<16x128xf32>
    %49 = arith.subf %47, %48 : vector<16x128xf32>
    %cst_8 = arith.constant 0.000000e+00 : f32
    %50 = vector.broadcast %cst_8 : f32 to vector<16x128xf32>
    %51 = arith.maximumf %39, %50 : vector<16x128xf32>
    %52 = arith.mulf %51, %51 : vector<16x128xf32>
    %cst_9 = arith.constant 0.000000e+00 : f32
    %53 = vector.broadcast %cst_9 : f32 to vector<16x128xf32>
    %54 = arith.maximumf %44, %53 : vector<16x128xf32>
    %55 = arith.mulf %54, %54 : vector<16x128xf32>
    %56 = arith.addf %52, %55 : vector<16x128xf32>
    %cst_10 = arith.constant 0.000000e+00 : f32
    %57 = vector.broadcast %cst_10 : f32 to vector<16x128xf32>
    %58 = arith.maximumf %49, %57 : vector<16x128xf32>
    %59 = arith.mulf %58, %58 : vector<16x128xf32>
    %60 = arith.addf %56, %59 : vector<16x128xf32>
    %61 = math.sqrt %60 : vector<16x128xf32>
    %62 = arith.maximumf %44, %49 : vector<16x128xf32>
    %63 = arith.maximumf %39, %62 : vector<16x128xf32>
    %cst_11 = arith.constant 0.000000e+00 : f32
    %64 = vector.broadcast %cst_11 : f32 to vector<16x128xf32>
    %65 = arith.minimumf %63, %64 : vector<16x128xf32>
    %66 = arith.addf %61, %65 : vector<16x128xf32>
    %67 = arith.subf %6, %66 : vector<16x128xf32>
    %68 = arith.maximumf %28, %67 : vector<16x128xf32>
    %69 = vector.extract_strided_slice %7 {offsets = [10, 0], sizes = [1, 128], strides = [1, 1]} : vector<32x128xf32> to vector<1x128xf32>
    %70 = vector.extract_strided_slice %7 {offsets = [11, 0], sizes = [1, 128], strides = [1, 1]} : vector<32x128xf32> to vector<1x128xf32>
    %71 = vector.extract_strided_slice %7 {offsets = [12, 0], sizes = [1, 128], strides = [1, 1]} : vector<32x128xf32> to vector<1x128xf32>
    %72 = vector.extract_strided_slice %7 {offsets = [13, 0], sizes = [1, 128], strides = [1, 1]} : vector<32x128xf32> to vector<1x128xf32>
    %73 = vector.extract_strided_slice %7 {offsets = [14, 0], sizes = [1, 128], strides = [1, 1]} : vector<32x128xf32> to vector<1x128xf32>
    %74 = vector.extract_strided_slice %7 {offsets = [15, 0], sizes = [1, 128], strides = [1, 1]} : vector<32x128xf32> to vector<1x128xf32>
    %75 = vector.broadcast %69 : vector<1x128xf32> to vector<16x128xf32>
    %76 = arith.subf %3, %75 : vector<16x128xf32>
    %77 = math.absf %76 : vector<16x128xf32>
    %78 = vector.broadcast %72 : vector<1x128xf32> to vector<16x128xf32>
    %79 = arith.subf %77, %78 : vector<16x128xf32>
    %80 = vector.broadcast %70 : vector<1x128xf32> to vector<16x128xf32>
    %81 = arith.subf %4, %80 : vector<16x128xf32>
    %82 = math.absf %81 : vector<16x128xf32>
    %83 = vector.broadcast %73 : vector<1x128xf32> to vector<16x128xf32>
    %84 = arith.subf %82, %83 : vector<16x128xf32>
    %85 = vector.broadcast %71 : vector<1x128xf32> to vector<16x128xf32>
    %86 = arith.subf %5, %85 : vector<16x128xf32>
    %87 = math.absf %86 : vector<16x128xf32>
    %88 = vector.broadcast %74 : vector<1x128xf32> to vector<16x128xf32>
    %89 = arith.subf %87, %88 : vector<16x128xf32>
    %cst_12 = arith.constant 0.000000e+00 : f32
    %90 = vector.broadcast %cst_12 : f32 to vector<16x128xf32>
    %91 = arith.maximumf %79, %90 : vector<16x128xf32>
    %92 = arith.mulf %91, %91 : vector<16x128xf32>
    %cst_13 = arith.constant 0.000000e+00 : f32
    %93 = vector.broadcast %cst_13 : f32 to vector<16x128xf32>
    %94 = arith.maximumf %84, %93 : vector<16x128xf32>
    %95 = arith.mulf %94, %94 : vector<16x128xf32>
    %96 = arith.addf %92, %95 : vector<16x128xf32>
    %cst_14 = arith.constant 0.000000e+00 : f32
    %97 = vector.broadcast %cst_14 : f32 to vector<16x128xf32>
    %98 = arith.maximumf %89, %97 : vector<16x128xf32>
    %99 = arith.mulf %98, %98 : vector<16x128xf32>
    %100 = arith.addf %96, %99 : vector<16x128xf32>
    %101 = math.sqrt %100 : vector<16x128xf32>
    %102 = arith.maximumf %84, %89 : vector<16x128xf32>
    %103 = arith.maximumf %79, %102 : vector<16x128xf32>
    %cst_15 = arith.constant 0.000000e+00 : f32
    %104 = vector.broadcast %cst_15 : f32 to vector<16x128xf32>
    %105 = arith.minimumf %103, %104 : vector<16x128xf32>
    %106 = arith.addf %101, %105 : vector<16x128xf32>
    %107 = arith.subf %6, %106 : vector<16x128xf32>
    %108 = arith.maximumf %68, %107 : vector<16x128xf32>
    %109 = vector.extract_strided_slice %7 {offsets = [16, 0], sizes = [1, 128], strides = [1, 1]} : vector<32x128xf32> to vector<1x128xf32>
    %110 = vector.extract_strided_slice %7 {offsets = [17, 0], sizes = [1, 128], strides = [1, 1]} : vector<32x128xf32> to vector<1x128xf32>
    %111 = vector.extract_strided_slice %7 {offsets = [18, 0], sizes = [1, 128], strides = [1, 1]} : vector<32x128xf32> to vector<1x128xf32>
    %112 = vector.extract_strided_slice %7 {offsets = [19, 0], sizes = [1, 128], strides = [1, 1]} : vector<32x128xf32> to vector<1x128xf32>
    %113 = vector.extract_strided_slice %7 {offsets = [20, 0], sizes = [1, 128], strides = [1, 1]} : vector<32x128xf32> to vector<1x128xf32>
    %114 = vector.extract_strided_slice %7 {offsets = [21, 0], sizes = [1, 128], strides = [1, 1]} : vector<32x128xf32> to vector<1x128xf32>
    %115 = vector.broadcast %109 : vector<1x128xf32> to vector<16x128xf32>
    %116 = arith.subf %3, %115 : vector<16x128xf32>
    %117 = math.absf %116 : vector<16x128xf32>
    %118 = vector.broadcast %112 : vector<1x128xf32> to vector<16x128xf32>
    %119 = arith.subf %117, %118 : vector<16x128xf32>
    %120 = vector.broadcast %110 : vector<1x128xf32> to vector<16x128xf32>
    %121 = arith.subf %4, %120 : vector<16x128xf32>
    %122 = math.absf %121 : vector<16x128xf32>
    %123 = vector.broadcast %113 : vector<1x128xf32> to vector<16x128xf32>
    %124 = arith.subf %122, %123 : vector<16x128xf32>
    %125 = vector.broadcast %111 : vector<1x128xf32> to vector<16x128xf32>
    %126 = arith.subf %5, %125 : vector<16x128xf32>
    %127 = math.absf %126 : vector<16x128xf32>
    %128 = vector.broadcast %114 : vector<1x128xf32> to vector<16x128xf32>
    %129 = arith.subf %127, %128 : vector<16x128xf32>
    %cst_16 = arith.constant 0.000000e+00 : f32
    %130 = vector.broadcast %cst_16 : f32 to vector<16x128xf32>
    %131 = arith.maximumf %119, %130 : vector<16x128xf32>
    %132 = arith.mulf %131, %131 : vector<16x128xf32>
    %cst_17 = arith.constant 0.000000e+00 : f32
    %133 = vector.broadcast %cst_17 : f32 to vector<16x128xf32>
    %134 = arith.maximumf %124, %133 : vector<16x128xf32>
    %135 = arith.mulf %134, %134 : vector<16x128xf32>
    %136 = arith.addf %132, %135 : vector<16x128xf32>
    %cst_18 = arith.constant 0.000000e+00 : f32
    %137 = vector.broadcast %cst_18 : f32 to vector<16x128xf32>
    %138 = arith.maximumf %129, %137 : vector<16x128xf32>
    %139 = arith.mulf %138, %138 : vector<16x128xf32>
    %140 = arith.addf %136, %139 : vector<16x128xf32>
    %141 = math.sqrt %140 : vector<16x128xf32>
    %142 = arith.maximumf %124, %129 : vector<16x128xf32>
    %143 = arith.maximumf %119, %142 : vector<16x128xf32>
    %cst_19 = arith.constant 0.000000e+00 : f32
    %144 = vector.broadcast %cst_19 : f32 to vector<16x128xf32>
    %145 = arith.minimumf %143, %144 : vector<16x128xf32>
    %146 = arith.addf %141, %145 : vector<16x128xf32>
    %147 = arith.subf %6, %146 : vector<16x128xf32>
    %148 = arith.maximumf %108, %147 : vector<16x128xf32>
    %149 = vector.extract_strided_slice %7 {offsets = [22, 0], sizes = [1, 128], strides = [1, 1]} : vector<32x128xf32> to vector<1x128xf32>
    %150 = vector.extract_strided_slice %7 {offsets = [23, 0], sizes = [1, 128], strides = [1, 1]} : vector<32x128xf32> to vector<1x128xf32>
    %151 = vector.extract_strided_slice %7 {offsets = [24, 0], sizes = [1, 128], strides = [1, 1]} : vector<32x128xf32> to vector<1x128xf32>
    %152 = vector.extract_strided_slice %7 {offsets = [25, 0], sizes = [1, 128], strides = [1, 1]} : vector<32x128xf32> to vector<1x128xf32>
    %153 = vector.extract_strided_slice %7 {offsets = [26, 0], sizes = [1, 128], strides = [1, 1]} : vector<32x128xf32> to vector<1x128xf32>
    %154 = vector.extract_strided_slice %7 {offsets = [27, 0], sizes = [1, 128], strides = [1, 1]} : vector<32x128xf32> to vector<1x128xf32>
    %155 = vector.broadcast %149 : vector<1x128xf32> to vector<16x128xf32>
    %156 = arith.subf %3, %155 : vector<16x128xf32>
    %157 = math.absf %156 : vector<16x128xf32>
    %158 = vector.broadcast %152 : vector<1x128xf32> to vector<16x128xf32>
    %159 = arith.subf %157, %158 : vector<16x128xf32>
    %160 = vector.broadcast %150 : vector<1x128xf32> to vector<16x128xf32>
    %161 = arith.subf %4, %160 : vector<16x128xf32>
    %162 = math.absf %161 : vector<16x128xf32>
    %163 = vector.broadcast %153 : vector<1x128xf32> to vector<16x128xf32>
    %164 = arith.subf %162, %163 : vector<16x128xf32>
    %165 = vector.broadcast %151 : vector<1x128xf32> to vector<16x128xf32>
    %166 = arith.subf %5, %165 : vector<16x128xf32>
    %167 = math.absf %166 : vector<16x128xf32>
    %168 = vector.broadcast %154 : vector<1x128xf32> to vector<16x128xf32>
    %169 = arith.subf %167, %168 : vector<16x128xf32>
    %cst_20 = arith.constant 0.000000e+00 : f32
    %170 = vector.broadcast %cst_20 : f32 to vector<16x128xf32>
    %171 = arith.maximumf %159, %170 : vector<16x128xf32>
    %172 = arith.mulf %171, %171 : vector<16x128xf32>
    %cst_21 = arith.constant 0.000000e+00 : f32
    %173 = vector.broadcast %cst_21 : f32 to vector<16x128xf32>
    %174 = arith.maximumf %164, %173 : vector<16x128xf32>
    %175 = arith.mulf %174, %174 : vector<16x128xf32>
    %176 = arith.addf %172, %175 : vector<16x128xf32>
    %cst_22 = arith.constant 0.000000e+00 : f32
    %177 = vector.broadcast %cst_22 : f32 to vector<16x128xf32>
    %178 = arith.maximumf %169, %177 : vector<16x128xf32>
    %179 = arith.mulf %178, %178 : vector<16x128xf32>
    %180 = arith.addf %176, %179 : vector<16x128xf32>
    %181 = math.sqrt %180 : vector<16x128xf32>
    %182 = arith.maximumf %164, %169 : vector<16x128xf32>
    %183 = arith.maximumf %159, %182 : vector<16x128xf32>
    %cst_23 = arith.constant 0.000000e+00 : f32
    %184 = vector.broadcast %cst_23 : f32 to vector<16x128xf32>
    %185 = arith.minimumf %183, %184 : vector<16x128xf32>
    %186 = arith.addf %181, %185 : vector<16x128xf32>
    %187 = arith.subf %6, %186 : vector<16x128xf32>
    %188 = arith.maximumf %148, %187 : vector<16x128xf32>
    %cst_24 = arith.constant dense<0.000000e+00> : vector<128xf32>
    %189 = vector.multi_reduction <add>, %188, %cst_24 [0] : vector<16x128xf32> to vector<128xf32>
    %190 = vector.shape_cast %189 : vector<128xf32> to vector<1x128xf32>
    %c0_25 = arith.constant 0 : index
    %c0_26 = arith.constant 0 : index
    %191 = vector.load %arg5[%c0_25, %c0_26] : memref<1x128xf32, #tpu.memory_space<vmem>>, vector<1x128xf32>
    tpu.vector_store %arg5[%c0_25, %c0_26], %190 {strides = array<i32>} : memref<1x128xf32, #tpu.memory_space<vmem>>, vector<1x128xf32>,
    return
  }
  func.func @transform_0(%arg0: i32) -> (i32, i32) {
    %c0_i32 = arith.constant 0 : i32
    %c0_i32_0 = arith.constant 0 : i32
    return %c0_i32, %arg0 : i32, i32
  }
  func.func @transform_1(%arg0: i32) -> (i32, i32) {
    %c0_i32 = arith.constant 0 : i32
    %c0_i32_0 = arith.constant 0 : i32
    %c0_i32_1 = arith.constant 0 : i32
    return %c0_i32, %c0_i32_0 : i32, i32
  }
  func.func @transform_2(%arg0: i32) -> (i32, i32) {
    %c0_i32 = arith.constant 0 : i32
    %c0_i32_0 = arith.constant 0 : i32
    %c0_i32_1 = arith.constant 0 : i32
    return %c0_i32, %c0_i32_0 : i32, i32
  }
  func.func @transform_3(%arg0: i32) -> (i32, i32) {
    %c0_i32 = arith.constant 0 : i32
    %c0_i32_0 = arith.constant 0 : i32
    return %c0_i32, %arg0 : i32, i32
  }
  func.func @transform_4(%arg0: i32) -> (i32, i32) {
    %c0_i32 = arith.constant 0 : i32
    %c0_i32_0 = arith.constant 0 : i32
    return %c0_i32, %arg0 : i32, i32
  }
}

</mosaic_0001>

<llo_original>
// kernel: tpu_custom_call.1
$region0: #{tpu_custom_call.1}
  #allocation0 [shape = 'u32[]', space=smem, size = 0x4, offset = 0x4, fixed_abs, tag = 'smem constant byte address 0x4 - core index']
  #allocation1 [shape = 'u32[144,128]{1,0:T(1,128)}', space=vmem, size = 0x12000, scoped, tag = 'internal scratch']
  %s0 = inlined_call_operand.vmem [shape: f32[8,128], index: 0, kind: input, shape index: {}]
  %s1 = inlined_call_operand.vmem [shape: f32[48,8], index: 1, kind: input, shape index: {}]
  %s2 = inlined_call_operand.vmem [shape: f32[16,128], index: 2, kind: input, shape index: {}]
  %s3 = inlined_call_operand.vmem [shape: f32[32,128], index: 3, kind: input, shape index: {}]
  %s4 = inlined_call_operand.hbm [shape: f32[1,128], index: 4, kind: output, shape index: {}]
  %s5 = sld [smem:[#allocation0]]
  $region26: #{tpu_custom_call.1} parent=0
    _
  %s7 = ssub.s32 1, %s5
  %s8 = scalar_select 0, %s7, %s5
  $region1: #{tpu_custom_call.1} parent=0
    #allocation2 [shape = 'u8[512]{0}', space=vmem, size = 0x400, scoped, tag = 'output window, operand 0, single buffered']
    #allocation3 [shape = 's32[1]{0}', space=sflag, size = 0x4, scoped, tag = 'scoped memory for tpu_custom_call.1']
    %9 = vsyncpa [#allocation3], 0
    // Predicated region
    $region2: #{tpu_custom_call.1} parent=1 // pred_check
      _
    $region3: #{tpu_custom_call.1} parent=1 // pred_check_branch
      %11 = sbr.rel (0) target = $region5
    $region4: #{tpu_custom_call.1} parent=1 // pred_region
      _
    $region5: #{tpu_custom_call.1} parent=1 // pred_fallthru
      _
    // Predicated region
    $region6: #{tpu_custom_call.1} parent=1 // pred_check
      _
    $region7: #{tpu_custom_call.1} parent=1 // pred_check_branch
      %13 = sbr.rel (0) target = $region9
    $region8: #{tpu_custom_call.1} parent=1 // pred_region
      _
    $region9: #{tpu_custom_call.1} parent=1 // pred_fallthru
      _
    // Predicated region
    $region10: #{tpu_custom_call.1} parent=1 // pred_check
      _
    $region11: #{tpu_custom_call.1} parent=1 // pred_check_branch
      %15 = sbr.rel (0) target = $region13
    $region12: #{tpu_custom_call.1} parent=1 // pred_region
      _
    $region13: #{tpu_custom_call.1} parent=1 // pred_fallthru
      _
    // Predicated region
    $region14: #{tpu_custom_call.1} parent=1 // pred_check
      _
    $region15: #{tpu_custom_call.1} parent=1 // pred_check_branch
      %17 = sbr.rel (0) target = $region17
    $region16: #{tpu_custom_call.1} parent=1 // pred_region
      _
    $region17: #{tpu_custom_call.1} parent=1 // pred_fallthru
      _
    %v18 = vld [vmem:[%s1] sm:$0xff]
    %v19 = vld [vmem:[%s1 + $0x8] sm:$0xff]
    %v20 = vld [vmem:[%s1 + $0x10] sm:$0xff]
    %v21 = vld [vmem:[%s1 + $0x18] sm:$0xff]
    %v22 = vld [vmem:[%s1 + $0x20] sm:$0xff]
    %v23 = vld [vmem:[%s1 + $0x28] sm:$0xff]
    %v24 = vld [vmem:[%s0] sm:$0xff]
    %vm25 = vcmask 64512
    %v27 = vsel %vm25, %v18, 0
    %v30 = vsel %vm25, %v19, 0
    %v33 = vsel %vm25, %v20, 0
    %v36 = vsel %vm25, %v21, 0
    %v39 = vsel %vm25, %v22, 0
    %v42 = vsel %vm25, %v23, 0
    %44 = vmatprep.subr.mxu0 0.0
    %45 = vmatpush1.msra.mxu0 %v24
    %46 = vmatprep.subr.mxu0 0.0
    %47 = vmatpush1.msra.mxu0 0.0
    %48 = vmatprep.subr.mxu0 0.0
    %49 = vmatpush1.msra.mxu0 0.0
    %50 = vmatprep.subr.mxu0 0.0
    %51 = vmatpush1.msra.mxu0 0.0
    %52 = vmatprep.subr.mxu0 0.0
    %53 = vmatpush1.msra.mxu0 0.0
    %54 = vmatprep.subr.mxu0 0.0
    %55 = vmatpush1.msra.mxu0 0.0
    %56 = vmatprep.subr.mxu0 0.0
    %57 = vmatpush1.msra.mxu0 0.0
    %58 = vmatprep.subr.mxu0 0.0
    %59 = vmatpush1.msra.mxu0 0.0
    %60 = vmatprep.subr.mxu0 0.0
    %61 = vmatpush1.msra.mxu0 0.0
    %62 = vmatprep.subr.mxu0 0.0
    %63 = vmatpush1.msra.mxu0 0.0
    %64 = vmatprep.subr.mxu0 0.0
    %65 = vmatpush1.msra.mxu0 0.0
    %66 = vmatprep.subr.mxu0 0.0
    %67 = vmatpush1.msra.mxu0 0.0
    %68 = vmatprep.subr.mxu0 0.0
    %69 = vmatpush1.msra.mxu0 0.0
    %70 = vmatprep.subr.mxu0 0.0
    %71 = vmatpush1.msra.mxu0 0.0
    %72 = vmatprep.subr.mxu0 0.0
    %73 = vmatpush1.msra.mxu0 0.0
    %74 = vmatprep.subr.mxu0 0.0
    %75 = vmatpush1.msra.mxu0 0.0
    %76 = vmatprep.subr.mxu0 0.0
    %77 = vmatpush1.msra.mxu0 0.0
    %78 = vmatprep.subr.mxu0 0.0
    %79 = vmatpush1.msra.mxu0 0.0
    %80 = vmatprep.subr.mxu0 0.0
    %81 = vmatpush1.msra.mxu0 0.0
    %82 = vmatprep.subr.mxu0 0.0
    %83 = vmatpush1.msra.mxu0 0.0
    %84 = vmatprep.subr.mxu0 0.0
    %85 = vmatpush1.msra.mxu0 0.0
    %86 = vmatprep.subr.mxu0 0.0
    %87 = vmatpush1.msra.mxu0 0.0
    %88 = vmatprep.subr.mxu0 0.0
    %89 = vmatpush1.msra.mxu0 0.0
    %90 = vmatprep.subr.mxu0 0.0
    %91 = vmatpush1.msra.mxu0 0.0
    %92 = vmatprep.subr.mxu0 0.0
    %93 = vmatpush1.msra.mxu0 0.0
    %94 = vmatprep.subr.mxu0 0.0
    %95 = vmatpush1.msra.mxu0 0.0
    %96 = vmatprep.subr.mxu0 0.0
    %97 = vmatpush1.msra.mxu0 0.0
    %98 = vmatprep.subr.mxu0 0.0
    %99 = vmatpush1.msra.mxu0 0.0
    %100 = vmatprep.subr.mxu0 0.0
    %101 = vmatpush1.msra.mxu0 0.0
    %102 = vmatprep.subr.mxu0 0.0
    %103 = vmatpush1.msra.mxu0 0.0
    %104 = vmatprep.subr.mxu0 0.0
    %105 = vmatpush1.msra.mxu0 0.0
    %106 = vmatprep.subr.mxu0 0.0
    %107 = vmatpush1.msra.mxu0 0.0
    %108 = vmatprep.mubr.f32.mxu0 0.0
    %109 = vmatmul.mubr.f32.gmra.mrb[0].mxu0 %v27
    %v110 = vpop.f32.mrb[0].mxu0
    %v111 = vadd.f32 0.0, %v110
    %v112 = vpop.f32.mrb[0].mxu0
    %113 = vmatprep.mubr.f32.mxu0 0.0
    %114 = vmatmul.mubr.f32.gmra.mrb[0].mxu0 %v30
    %v115 = vpop.f32.mrb[0].mxu0
    %v116 = vadd.f32 0.0, %v115
    %v117 = vpop.f32.mrb[0].mxu0
    %118 = vmatprep.mubr.f32.mxu0 0.0
    %119 = vmatmul.mubr.f32.gmra.mrb[0].mxu0 %v33
    %v120 = vpop.f32.mrb[0].mxu0
    %v121 = vadd.f32 0.0, %v120
    %v122 = vpop.f32.mrb[0].mxu0
    %123 = vmatprep.mubr.f32.mxu0 0.0
    %124 = vmatmul.mubr.f32.gmra.mrb[0].mxu0 %v36
    %v125 = vpop.f32.mrb[0].mxu0
    %v126 = vadd.f32 0.0, %v125
    %v127 = vpop.f32.mrb[0].mxu0
    %128 = vmatprep.mubr.f32.mxu0 0.0
    %129 = vmatmul.mubr.f32.gmra.mrb[0].mxu0 %v39
    %v130 = vpop.f32.mrb[0].mxu0
    %v131 = vadd.f32 0.0, %v130
    %v132 = vpop.f32.mrb[0].mxu0
    %133 = vmatprep.mubr.f32.mxu0 0.0
    %134 = vmatmul.mubr.f32.gmra.mrb[0].mxu0 %v42
    %v135 = vpop.f32.mrb[0].mxu0
    %v136 = vadd.f32 0.0, %v135
    %v137 = vpop.f32.mrb[0].mxu0
    %138 = vdwg.mxu0
    %v139 = vld [vmem:[%s2] sm:$0xff]
    %v140 = vld [vmem:[%s2 + $0x8] sm:$0xff]
    %v141 = vld [vmem:[%s3] sm:$0xff]
    %v142 = vld [vmem:[%s3 + $0x8] sm:$0xff]
    %v143 = vld [vmem:[%s3 + $0x10] sm:$0xff]
    %v144 = vld [vmem:[%s3 + $0x18] sm:$0xff]
    %v145 = vlaneseq
    %v146 = vshrl.u32 %v145, 7
    %v147 = vsub.s32 0, %v146
    %v148 = vrot.slane %v141, %v147
    %v149 = vsub.f32 %v111, %v148
    %v150 = vsub.f32 %v116, %v148
    %v151 = vmul.f32 %v149, %v149
    %v152 = vmul.f32 %v150, %v150
    %v153 = vlaneseq
    %v154 = vshrl.u32 %v153, 7
    %v155 = vsub.s32 1, %v154
    %v156 = vrot.slane %v141, %v155
    %v157 = vsub.f32 %v121, %v156
    %v158 = vsub.f32 %v126, %v156
    %v159 = vmul.f32 %v157, %v157
    %v160 = vmul.f32 %v158, %v158
    %v161 = vadd.f32 %v151, %v159
    %v162 = vadd.f32 %v152, %v160
    %v163 = vlaneseq
    %v164 = vshrl.u32 %v163, 7
    %v165 = vsub.s32 2, %v164
    %v166 = vrot.slane %v141, %v165
    %v167 = vsub.f32 %v131, %v166
    %v168 = vsub.f32 %v136, %v166
    %v169 = vmul.f32 %v167, %v167
    %v170 = vmul.f32 %v168, %v168
    %v171 = vadd.f32 %v161, %v169
    %v172 = vadd.f32 %v162, %v170
    %v173 = vrsqrt.pop %v171
    %v174 = vmul.f32 %v171, %v173
    %vm175 = vcmp.eq.f32.partialorder %v171, inf
    %v176 = vsel %vm175, %v171, %v174
    %vm177 = vcmp.eq.f32.partialorder %v171, 0.0
    %v178 = vand.u32 %v171, 2147483648
    %v179 = vsel %vm177, %v178, %v176
    %v180 = vrsqrt.pop %v172
    %v181 = vmul.f32 %v172, %v180
    %vm182 = vcmp.eq.f32.partialorder %v172, inf
    %v183 = vsel %vm182, %v172, %v181
    %vm184 = vcmp.eq.f32.partialorder %v172, 0.0
    %v185 = vand.u32 %v172, 2147483648
    %v186 = vsel %vm184, %v185, %v183
    %v187 = vsub.f32 %v139, %v179
    %v188 = vsub.f32 %v140, %v186
    %v189 = vlaneseq
    %v190 = vshrl.u32 %v189, 7
    %v191 = vsub.s32 3, %v190
    %v192 = vrot.slane %v141, %v191
    %v193 = vadd.f32 %v187, %v192
    %v194 = vadd.f32 %v188, %v192
    %v195 = vmax.f32 %v193, 0.0
    %v196 = vmax.f32 %v194, 0.0
    %v197 = vlaneseq
    %v198 = vshrl.u32 %v197, 7
    %v199 = vsub.s32 4, %v198
    %v200 = vrot.slane %v141, %v199
    %v201 = vsub.f32 %v111, %v200
    %v202 = vsub.f32 %v116, %v200
    %v203 = vand.u32 2147483647, %v201
    %v204 = vand.u32 2147483647, %v202
    %v205 = vlaneseq
    %v206 = vshrl.u32 %v205, 7
    %v207 = vsub.s32 7, %v206
    %v208 = vrot.slane %v141, %v207
    %v209 = vsub.f32 %v203, %v208
    %v210 = vsub.f32 %v204, %v208
    %v211 = vlaneseq
    %v212 = vshrl.u32 %v211, 7
    %v213 = vsub.s32 5, %v212
    %v214 = vrot.slane %v141, %v213
    %v215 = vsub.f32 %v121, %v214
    %v216 = vsub.f32 %v126, %v214
    %v217 = vand.u32 2147483647, %v215
    %v218 = vand.u32 2147483647, %v216
    %v219 = vlaneseq
    %v220 = vshrl.u32 %v219, 7
    %v221 = vsub.s32 0, %v220
    %v222 = vrot.slane %v142, %v221
    %v223 = vsub.f32 %v217, %v222
    %v224 = vsub.f32 %v218, %v222
    %v225 = vlaneseq
    %v226 = vshrl.u32 %v225, 7
    %v227 = vsub.s32 6, %v226
    %v228 = vrot.slane %v141, %v227
    %v229 = vsub.f32 %v131, %v228
    %v230 = vsub.f32 %v136, %v228
    %v231 = vand.u32 2147483647, %v229
    %v232 = vand.u32 2147483647, %v230
    %v233 = vlaneseq
    %v234 = vshrl.u32 %v233, 7
    %v235 = vsub.s32 1, %v234
    %v236 = vrot.slane %v142, %v235
    %v237 = vsub.f32 %v231, %v236
    %v238 = vsub.f32 %v232, %v236
    %v239 = vmax.f32 %v209, 0.0
    %v240 = vmax.f32 %v210, 0.0
    %v241 = vmul.f32 %v239, %v239
    %v242 = vmul.f32 %v240, %v240
    %v243 = vmax.f32 %v223, 0.0
    %v244 = vmax.f32 %v224, 0.0
    %v245 = vmul.f32 %v243, %v243
    %v246 = vmul.f32 %v244, %v244
    %v247 = vadd.f32 %v241, %v245
    %v248 = vadd.f32 %v242, %v246
    %v249 = vmax.f32 %v237, 0.0
    %v250 = vmax.f32 %v238, 0.0
    %v251 = vmul.f32 %v249, %v249
    %v252 = vmul.f32 %v250, %v250
    %v253 = vadd.f32 %v247, %v251
    %v254 = vadd.f32 %v248, %v252
    %v255 = vrsqrt.pop %v253
    %v256 = vmul.f32 %v253, %v255
    %vm257 = vcmp.eq.f32.partialorder %v253, inf
    %v258 = vsel %vm257, %v253, %v256
    %vm259 = vcmp.eq.f32.partialorder %v253, 0.0
    %v260 = vand.u32 %v253, 2147483648
    %v261 = vsel %vm259, %v260, %v258
    %v262 = vrsqrt.pop %v254
    %v263 = vmul.f32 %v254, %v262
    %vm264 = vcmp.eq.f32.partialorder %v254, inf
    %v265 = vsel %vm264, %v254, %v263
    %vm266 = vcmp.eq.f32.partialorder %v254, 0.0
    %v267 = vand.u32 %v254, 2147483648
    %v268 = vsel %vm266, %v267, %v265
    %v269 = vmax.f32 %v223, %v237
    %v270 = vmax.f32 %v224, %v238
    %v271 = vmax.f32 %v209, %v269
    %v272 = vmax.f32 %v210, %v270
    %v273 = vmin.f32 %v271, 0.0
    %v274 = vmin.f32 %v272, 0.0
    %v275 = vadd.f32 %v261, %v273
    %v276 = vadd.f32 %v268, %v274
    %v277 = vsub.f32 %v139, %v275
    %v278 = vsub.f32 %v140, %v276
    %v279 = vmax.f32 %v195, %v277
    %v280 = vmax.f32 %v196, %v278
    %v281 = vlaneseq
    %v282 = vshrl.u32 %v281, 7
    %v283 = vsub.s32 2, %v282
    %v284 = vrot.slane %v142, %v283
    %v285 = vsub.f32 %v111, %v284
    %v286 = vsub.f32 %v116, %v284
    %v287 = vand.u32 2147483647, %v285
    %v288 = vand.u32 2147483647, %v286
    %v289 = vlaneseq
    %v290 = vshrl.u32 %v289, 7
    %v291 = vsub.s32 5, %v290
    %v292 = vrot.slane %v142, %v291
    %v293 = vsub.f32 %v287, %v292
    %v294 = vsub.f32 %v288, %v292
    %v295 = vlaneseq
    %v296 = vshrl.u32 %v295, 7
    %v297 = vsub.s32 3, %v296
    %v298 = vrot.slane %v142, %v297
    %v299 = vsub.f32 %v121, %v298
    %v300 = vsub.f32 %v126, %v298
    %v301 = vand.u32 2147483647, %v299
    %v302 = vand.u32 2147483647, %v300
    %v303 = vlaneseq
    %v304 = vshrl.u32 %v303, 7
    %v305 = vsub.s32 6, %v304
    %v306 = vrot.slane %v142, %v305
    %v307 = vsub.f32 %v301, %v306
    %v308 = vsub.f32 %v302, %v306
    %v309 = vlaneseq
    %v310 = vshrl.u32 %v309, 7
    %v311 = vsub.s32 4, %v310
    %v312 = vrot.slane %v142, %v311
    %v313 = vsub.f32 %v131, %v312
    %v314 = vsub.f32 %v136, %v312
    %v315 = vand.u32 2147483647, %v313
    %v316 = vand.u32 2147483647, %v314
    %v317 = vlaneseq
    %v318 = vshrl.u32 %v317, 7
    %v319 = vsub.s32 7, %v318
    %v320 = vrot.slane %v142, %v319
    %v321 = vsub.f32 %v315, %v320
    %v322 = vsub.f32 %v316, %v320
    %v323 = vmax.f32 %v293, 0.0
    %v324 = vmax.f32 %v294, 0.0
    %v325 = vmul.f32 %v323, %v323
    %v326 = vmul.f32 %v324, %v324
    %v327 = vmax.f32 %v307, 0.0
    %v328 = vmax.f32 %v308, 0.0
    %v329 = vmul.f32 %v327, %v327
    %v330 = vmul.f32 %v328, %v328
    %v331 = vadd.f32 %v325, %v329
    %v332 = vadd.f32 %v326, %v330
    %v333 = vmax.f32 %v321, 0.0
    %v334 = vmax.f32 %v322, 0.0
    %v335 = vmul.f32 %v333, %v333
    %v336 = vmul.f32 %v334, %v334
    %v337 = vadd.f32 %v331, %v335
    %v338 = vadd.f32 %v332, %v336
    %v339 = vrsqrt.pop %v337
    %v340 = vmul.f32 %v337, %v339
    %vm341 = vcmp.eq.f32.partialorder %v337, inf
    %v342 = vsel %vm341, %v337, %v340
    %vm343 = vcmp.eq.f32.partialorder %v337, 0.0
    %v344 = vand.u32 %v337, 2147483648
    %v345 = vsel %vm343, %v344, %v342
    %v346 = vrsqrt.pop %v338
    %v347 = vmul.f32 %v338, %v346
    %vm348 = vcmp.eq.f32.partialorder %v338, inf
    %v349 = vsel %vm348, %v338, %v347
    %vm350 = vcmp.eq.f32.partialorder %v338, 0.0
    %v351 = vand.u32 %v338, 2147483648
    %v352 = vsel %vm350, %v351, %v349
    %v353 = vmax.f32 %v307, %v321
    %v354 = vmax.f32 %v308, %v322
    %v355 = vmax.f32 %v293, %v353
    %v356 = vmax.f32 %v294, %v354
    %v357 = vmin.f32 %v355, 0.0
    %v358 = vmin.f32 %v356, 0.0
    %v359 = vadd.f32 %v345, %v357
    %v360 = vadd.f32 %v352, %v358
    %v361 = vsub.f32 %v139, %v359
    %v362 = vsub.f32 %v140, %v360
    %v363 = vmax.f32 %v279, %v361
    %v364 = vmax.f32 %v280, %v362
    %v365 = vlaneseq
    %v366 = vshrl.u32 %v365, 7
    %v367 = vsub.s32 0, %v366
    %v368 = vrot.slane %v143, %v367
    %v369 = vsub.f32 %v111, %v368
    %v370 = vsub.f32 %v116, %v368
    %v371 = vand.u32 2147483647, %v369
    %v372 = vand.u32 2147483647, %v370
    %v373 = vlaneseq
    %v374 = vshrl.u32 %v373, 7
    %v375 = vsub.s32 3, %v374
    %v376 = vrot.slane %v143, %v375
    %v377 = vsub.f32 %v371, %v376
    %v378 = vsub.f32 %v372, %v376
    %v379 = vlaneseq
    %v380 = vshrl.u32 %v379, 7
    %v381 = vsub.s32 1, %v380
    %v382 = vrot.slane %v143, %v381
    %v383 = vsub.f32 %v121, %v382
    %v384 = vsub.f32 %v126, %v382
    %v385 = vand.u32 2147483647, %v383
    %v386 = vand.u32 2147483647, %v384
    %v387 = vlaneseq
    %v388 = vshrl.u32 %v387, 7
    %v389 = vsub.s32 4, %v388
    %v390 = vrot.slane %v143, %v389
    %v391 = vsub.f32 %v385, %v390
    %v392 = vsub.f32 %v386, %v390
    %v393 = vlaneseq
    %v394 = vshrl.u32 %v393, 7
    %v395 = vsub.s32 2, %v394
    %v396 = vrot.slane %v143, %v395
    %v397 = vsub.f32 %v131, %v396
    %v398 = vsub.f32 %v136, %v396
    %v399 = vand.u32 2147483647, %v397
    %v400 = vand.u32 2147483647, %v398
    %v401 = vlaneseq
    %v402 = vshrl.u32 %v401, 7
    %v403 = vsub.s32 5, %v402
    %v404 = vrot.slane %v143, %v403
    %v405 = vsub.f32 %v399, %v404
    %v406 = vsub.f32 %v400, %v404
    %v407 = vmax.f32 %v377, 0.0
    %v408 = vmax.f32 %v378, 0.0
    %v409 = vmul.f32 %v407, %v407
    %v410 = vmul.f32 %v408, %v408
    %v411 = vmax.f32 %v391, 0.0
    %v412 = vmax.f32 %v392, 0.0
    %v413 = vmul.f32 %v411, %v411
    %v414 = vmul.f32 %v412, %v412
    %v415 = vadd.f32 %v409, %v413
    %v416 = vadd.f32 %v410, %v414
    %v417 = vmax.f32 %v405, 0.0
    %v418 = vmax.f32 %v406, 0.0
    %v419 = vmul.f32 %v417, %v417
    %v420 = vmul.f32 %v418, %v418
    %v421 = vadd.f32 %v415, %v419
    %v422 = vadd.f32 %v416, %v420
    %v423 = vrsqrt.pop %v421
    %v424 = vmul.f32 %v421, %v423
    %vm425 = vcmp.eq.f32.partialorder %v421, inf
    %v426 = vsel %vm425, %v421, %v424
    %vm427 = vcmp.eq.f32.partialorder %v421, 0.0
    %v428 = vand.u32 %v421, 2147483648
    %v429 = vsel %vm427, %v428, %v426
    %v430 = vrsqrt.pop %v422
    %v431 = vmul.f32 %v422, %v430
    %vm432 = vcmp.eq.f32.partialorder %v422, inf
    %v433 = vsel %vm432, %v422, %v431
    %vm434 = vcmp.eq.f32.partialorder %v422, 0.0
    %v435 = vand.u32 %v422, 2147483648
    %v436 = vsel %vm434, %v435, %v433
    %v437 = vmax.f32 %v391, %v405
    %v438 = vmax.f32 %v392, %v406
    %v439 = vmax.f32 %v377, %v437
    %v440 = vmax.f32 %v378, %v438
    %v441 = vmin.f32 %v439, 0.0
    %v442 = vmin.f32 %v440, 0.0
    %v443 = vadd.f32 %v429, %v441
    %v444 = vadd.f32 %v436, %v442
    %v445 = vsub.f32 %v139, %v443
    %v446 = vsub.f32 %v140, %v444
    %v447 = vmax.f32 %v363, %v445
    %v448 = vmax.f32 %v364, %v446
    %v449 = vlaneseq
    %v450 = vshrl.u32 %v449, 7
    %v451 = vsub.s32 6, %v450
    %v452 = vrot.slane %v143, %v451
    %v453 = vsub.f32 %v111, %v452
    %v454 = vsub.f32 %v116, %v452
    %v455 = vand.u32 2147483647, %v453
    %v456 = vand.u32 2147483647, %v454
    %v457 = vlaneseq
    %v458 = vshrl.u32 %v457, 7
    %v459 = vsub.s32 1, %v458
    %v460 = vrot.slane %v144, %v459
    %v461 = vsub.f32 %v455, %v460
    %v462 = vsub.f32 %v456, %v460
    %v463 = vlaneseq
    %v464 = vshrl.u32 %v463, 7
    %v465 = vsub.s32 7, %v464
    %v466 = vrot.slane %v143, %v465
    %v467 = vsub.f32 %v121, %v466
    %v468 = vsub.f32 %v126, %v466
    %v469 = vand.u32 2147483647, %v467
    %v470 = vand.u32 2147483647, %v468
    %v471 = vlaneseq
    %v472 = vshrl.u32 %v471, 7
    %v473 = vsub.s32 2, %v472
    %v474 = vrot.slane %v144, %v473
    %v475 = vsub.f32 %v469, %v474
    %v476 = vsub.f32 %v470, %v474
    %v477 = vlaneseq
    %v478 = vshrl.u32 %v477, 7
    %v479 = vsub.s32 0, %v478
    %v480 = vrot.slane %v144, %v479
    %v481 = vsub.f32 %v131, %v480
    %v482 = vsub.f32 %v136, %v480
    %v483 = vand.u32 2147483647, %v481
    %v484 = vand.u32 2147483647, %v482
    %v485 = vlaneseq
    %v486 = vshrl.u32 %v485, 7
    %v487 = vsub.s32 3, %v486
    %v488 = vrot.slane %v144, %v487
    %v489 = vsub.f32 %v483, %v488
    %v490 = vsub.f32 %v484, %v488
    %v491 = vmax.f32 %v461, 0.0
    %v492 = vmax.f32 %v462, 0.0
    %v493 = vmul.f32 %v491, %v491
    %v494 = vmul.f32 %v492, %v492
    %v495 = vmax.f32 %v475, 0.0
    %v496 = vmax.f32 %v476, 0.0
    %v497 = vmul.f32 %v495, %v495
    %v498 = vmul.f32 %v496, %v496
    %v499 = vadd.f32 %v493, %v497
    %v500 = vadd.f32 %v494, %v498
    %v501 = vmax.f32 %v489, 0.0
    %v502 = vmax.f32 %v490, 0.0
    %v503 = vmul.f32 %v501, %v501
    %v504 = vmul.f32 %v502, %v502
    %v505 = vadd.f32 %v499, %v503
    %v506 = vadd.f32 %v500, %v504
    %v507 = vrsqrt.pop %v505
    %v508 = vmul.f32 %v505, %v507
    %vm509 = vcmp.eq.f32.partialorder %v505, inf
    %v510 = vsel %vm509, %v505, %v508
    %vm511 = vcmp.eq.f32.partialorder %v505, 0.0
    %v512 = vand.u32 %v505, 2147483648
    %v513 = vsel %vm511, %v512, %v510
    %v514 = vrsqrt.pop %v506
    %v515 = vmul.f32 %v506, %v514
    %vm516 = vcmp.eq.f32.partialorder %v506, inf
    %v517 = vsel %vm516, %v506, %v515
    %vm518 = vcmp.eq.f32.partialorder %v506, 0.0
    %v519 = vand.u32 %v506, 2147483648
    %v520 = vsel %vm518, %v519, %v517
    %v521 = vmax.f32 %v475, %v489
    %v522 = vmax.f32 %v476, %v490
    %v523 = vmax.f32 %v461, %v521
    %v524 = vmax.f32 %v462, %v522
    %v525 = vmin.f32 %v523, 0.0
    %v526 = vmin.f32 %v524, 0.0
    %v527 = vadd.f32 %v513, %v525
    %v528 = vadd.f32 %v520, %v526
    %v529 = vsub.f32 %v139, %v527
    %v530 = vsub.f32 %v140, %v528
    %v531 = vmax.f32 %v447, %v529
    %v532 = vmax.f32 %v448, %v530
    %v533 = vadd.f32 %v531, %v532
    %v534 = vrot.slane %v533, 4
    %v535 = vadd.f32 %v533, %v534
    %v536 = vrot.slane %v535, 2
    %v537 = vadd.f32 %v535, %v536
    %v538 = vrot.slane %v537, 1
    %v539 = vadd.f32 %v537, %v538
    %540 = vst [vmem:[#allocation2] sm:$0x1] %v539
    // Predicated region
    $region18: #{tpu_custom_call.1} parent=1 // pred_check
      _
    $region19: #{tpu_custom_call.1} parent=1 // pred_check_branch
      %542 = sbr.rel (0) target = $region21
    $region20: #{tpu_custom_call.1} parent=1 // pred_region
      %s544 = ssub.s32 16, 16
      %545 = vsyncadd [#allocation3], %s544
      %s547 = sshll.u32 [#allocation2], 4
      %s548 = int_to_ptr.vmem [resolvable:$true] %s547
      %550 = dma.vmem_to_hbm [thread:$0]  %s548, 16, %s4, [#allocation3]
    $region21: #{tpu_custom_call.1} parent=1 // pred_fallthru
      _
    // Predicated region
    $region22: #{tpu_custom_call.1} parent=1 // pred_check
      _
    $region23: #{tpu_custom_call.1} parent=1 // pred_check_branch
      %552 = sbr.rel (0) target = $region25
    $region24: #{tpu_custom_call.1} parent=1 // pred_region
      %553 = dma.done [#allocation3], 16
    $region25: #{tpu_custom_call.1} parent=1 // pred_fallthru
      _
    %554 = vsyncpa [#allocation3], 1

</llo_original>
